<compile_context>
chip_gen: v7x
topology: tpu7x:2x2x1
jax: 0.10.0
libtpu: 0.0.40
codegen_flags: <defaults>
</compile_context>

<pallas_src>
import jax
import jax.numpy as jnp
from jax.experimental import pallas as pl
from jax.experimental.pallas import tpu as pltpu

ALPHA1, ALPHA2, ALPHA3 = 0.2, 0.2, 0.4
_C1 = ALPHA1 / (1.0 - ALPHA1)
_C2 = ALPHA2 / (1.0 - ALPHA2)
_C3 = ALPHA3 / (1.0 - ALPHA3)


def _poxel_gcn_kernel(a_ref, x_ref, batch_ref, w_ref, wg_ref, bn_ref, out_ref):
    a_bf = a_ref[...]                               # [N, N] bf16, resident for all 3 layers
    x0 = x_ref[...]                                 # [N, H] f32 original features (x_0)
    x0_bf = x0.astype(jnp.bfloat16)

    def gcn2_layer(h_bf, c, w_idx):
        # GCN2Conv (shared_weights=True, theta=None => beta=1), with (1-alpha) folded
        # into the pre-scaled weight stack:
        #   out = relu((A_norm @ h + c * x0) @ ((1-alpha) * W)),   c = alpha/(1-alpha)
        prop = jnp.dot(a_bf, h_bf, preferred_element_type=jnp.float32)   # [N, H] f32 (MXU)
        s = prop + c * x0                                                # f32 VPU blend
        out = jnp.dot(s.astype(jnp.bfloat16), w_ref[w_idx],
                      preferred_element_type=jnp.float32)                # [N, H] f32 (MXU)
        return jnp.maximum(out, 0.0)

    h = gcn2_layer(x0_bf, _C1, 0)
    h = gcn2_layer(h.astype(jnp.bfloat16), _C2, 1)
    h = gcn2_layer(h.astype(jnp.bfloat16), _C3, 2)
    h_bf = h.astype(jnp.bfloat16)                                        # [N, H] bf16

    n = h.shape[0]
    b = out_ref.shape[0]

    # Gate directly in row layout [1, N]: contract wg [1,H] with h [N,H] over H.
    # (The gate bias is a per-node constant and cancels in the segment softmax.)
    gate_row = jax.lax.dot_general(
        wg_ref[...], h_bf, (((1,), (1,)), ((), ())),
        preferred_element_type=jnp.float32)                              # [1, N]

    # One-hot graph-membership mask in [B, N] (lane-dense) from the batch vector.
    batch_row = batch_ref[...]                                           # [1, N] int32
    mask = jax.lax.broadcasted_iota(jnp.int32, (b, n), 0) == batch_row   # [B, N] bool
    mask_f = mask.astype(jnp.float32)

    # Segment softmax, numerically safe (finite sentinel, masked exp, clamped denom).
    neg = jnp.float32(-3.0e38)
    seg_max = jnp.max(jnp.where(mask, gate_row, neg), axis=1, keepdims=True)   # [B, 1]
    shifted = jnp.where(mask, gate_row - seg_max, 0.0)                         # [B, N] <= 0
    exp_bn = mask_f * jnp.exp(shifted)                                         # [B, N]
    seg_sum = jnp.maximum(jnp.sum(exp_bn, axis=1, keepdims=True),
                          jnp.float32(1e-30))                                  # [B, 1]
    # EUP reciprocal instead of a VALU divide.  (Empty segments -> attn == 0,
    # out[b] == bn, rather than a 0/0 NaN.)
    attn_bn = exp_bn * pl.reciprocal(seg_sum, approx=True)                     # [B, N]

    # Pool before projecting: out = (attn @ h) @ Wn + bn   (attn rows sum to 1, so bn
    # passes through).  The pooling matmul is tiny -> keep it fully in f32 to avoid
    # the bf16 cast of the attention weights (dominant accuracy loss).
    pooled = jnp.dot(attn_bn, h, preferred_element_type=jnp.float32)           # [B, H]
    out_ref[...] = jnp.dot(pooled.astype(jnp.bfloat16), w_ref[3],
                           preferred_element_type=jnp.float32) + bn_ref[...]


def _vmem_limit_bytes():
    """Generation-aware VMEM cap: ~80% of the chip's physical VMEM."""
    cap = None
    try:
        cap = getattr(pltpu.get_tpu_info(), "vmem_capacity_bytes", None)
    except Exception:
        cap = None
    if not cap:
        cap = 64 * 1024 * 1024      # conservative fallback (v7x per-TC physical)
    return int(cap * 0.8)


def _prepare_operands(a_norm, x, batch, params):
    """Host-side operand prep: bf16 A, folded/stacked bf16 weights, row-layout vectors."""
    n, hidden = x.shape
    w1, w2, w3, wg, bg, wn, bn = params
    del bg  # constant gate bias cancels inside the segment softmax

    a_bf = a_norm.astype(jnp.bfloat16)                          # half the A DMA bytes
    # Fold (1 - alpha_l) into the GCN2 weights; Wn stays unscaled.
    w_stack = jnp.stack([(1.0 - ALPHA1) * w1,
                         (1.0 - ALPHA2) * w2,
                         (1.0 - ALPHA3) * w3,
                         wn]).astype(jnp.bfloat16)              # [4, H, H]
    wg_row = wg.reshape(1, hidden).astype(jnp.bfloat16)         # [1, H]
    bn_row = bn.reshape(1, hidden).astype(jnp.float32)          # [1, H]
    batch_row = batch.astype(jnp.int32).reshape(1, n)           # [1, N]
    return a_bf, x.astype(jnp.float32), batch_row, w_stack, wg_row, bn_row


def simple_poxel_gcn(a_norm, x, batch, params, num_graphs):
    n, hidden = x.shape
    operands = _prepare_operands(a_norm, x, batch, params)

    # Whole-array VMEM refs, no grid: single invocation, no pipeline double-buffering.
    vmem_spec = pl.BlockSpec(memory_space=pltpu.MemorySpace.VMEM)

    return pl.pallas_call(
        _poxel_gcn_kernel,
        out_shape=jax.ShapeDtypeStruct((num_graphs, hidden), jnp.float32),
        in_specs=[vmem_spec] * len(operands),
        out_specs=vmem_spec,
        compiler_params=pltpu.CompilerParams(
            vmem_limit_bytes=_vmem_limit_bytes()),
    )(*operands)


def gcn_norm_dense(edge_index, edge_weight, num_nodes):
    """Dense equivalent of PyG gcn_norm: add self-loops (weight 1) + sym norm."""
    src, dst = edge_index[0], edge_index[1]
    a = jnp.zeros((num_nodes, num_nodes), jnp.float32)
    a = a.at[dst, src].add(edge_weight)            # messages flow src -> dst
    a = a + jnp.eye(num_nodes, dtype=jnp.float32)  # add self-loops
    deg = a.sum(axis=1)
    dinv = jnp.where(deg > 0, jax.lax.rsqrt(deg), 0.0)
    return dinv[:, None] * a * dinv[None, :]


def ref_forward(a_norm, x, batch, params, num_graphs):
    """Pure-JAX f32 reference with the original module's exact semantics."""
    w1, w2, w3, wg, bg, wn, bn = params

    def layer(h, alpha, w):
        return jax.nn.relu(((1.0 - alpha) * (a_norm @ h) + alpha * x) @ w)

    h = layer(x, ALPHA1, w1)
    h = layer(h, ALPHA2, w2)
    h = layer(h, ALPHA3, w3)
    gate = (h @ wg + bg)[:, 0]
    v = h @ wn + bn
    seg_max = jax.ops.segment_max(gate, batch, num_segments=num_graphs)
    e = jnp.exp(gate - seg_max[batch])
    seg_sum = jax.ops.segment_sum(e, batch, num_segments=num_graphs)
    attn = e / seg_sum[batch]
    return jax.ops.segment_sum(attn[:, None] * v, batch, num_segments=num_graphs)


def ref_forward_kernel_path(operands, batch, num_graphs):
    """Pure-JAX emulation of the kernel's arithmetic (same bf16-quantized operands,
    bf16-at-MXU rounding, folded weights, f32 pooling) for a tight check.  Remaining
    deltas vs. the kernel: MXU accumulation order + the approx EUP reciprocal."""
    a_bf, x, batch_row, w_stack, wg_row, bn_row = operands
    f32 = lambda t: t.astype(jnp.float32)
    bf = lambda t: t.astype(jnp.bfloat16).astype(jnp.float32)
    a = f32(a_bf)

    def layer(h, c, w_bf):
        prop = a @ bf(h)
        s = prop + c * x
        return jax.nn.relu(bf(s) @ f32(w_bf))

    h = layer(x, _C1, w_stack[0])
    h = layer(h, _C2, w_stack[1])
    h = layer(h, _C3, w_stack[2])
    hb = bf(h)
    gate = (f32(wg_row) @ hb.T)[0]                                    # [N]
    seg_max = jax.ops.segment_max(gate, batch, num_segments=num_graphs)
    e = jnp.exp(gate - seg_max[batch])
    seg_sum = jax.ops.segment_sum(e, batch, num_segments=num_graphs)
    attn = e / seg_sum[batch]
    pooled = jax.ops.segment_sum(attn[:, None] * h, batch,
                                 num_segments=num_graphs)             # [B, H] f32
    return bf(pooled) @ f32(w_stack[3]) + bn_row


if __name__ == "__main__":
    key = jax.random.PRNGKey(0)
    N, H, B, E = 64, 32, 2, 256        # nodes, hidden, graphs, edges
    ks = jax.random.split(key, 12)

    # graph data
    x = jax.random.normal(ks[0], (N, H), jnp.float32)
    src = jax.random.randint(ks[1], (E,), 0, N)
    dst = jax.random.randint(ks[2], (E,), 0, N)
    dst = jnp.where(dst == src, (dst + 1) % N, dst)   # keep inputs free of self-loops
    edge_index = jnp.stack([src, dst]).astype(jnp.int32)
    edge_attr = jax.random.uniform(ks[3], (E,), jnp.float32, 0.1, 1.0)
    batch = jnp.concatenate([jnp.zeros(N // 2, jnp.int32),
                             jnp.ones(N - N // 2, jnp.int32)])

    # deterministic parameter init (GCN2Conv weights have no bias; MLPs are single Linear)
    scale = 1.0 / jnp.sqrt(jnp.float32(H))
    w1 = jax.random.normal(ks[4], (H, H), jnp.float32) * scale
    w2 = jax.random.normal(ks[5], (H, H), jnp.float32) * scale
    w3 = jax.random.normal(ks[6], (H, H), jnp.float32) * scale
    wg = jax.random.normal(ks[7], (H, 1), jnp.float32) * scale
    bg = jax.random.normal(ks[8], (1, 1), jnp.float32) * 0.1
    wn = jax.random.normal(ks[9], (H, H), jnp.float32) * scale
    bn = jax.random.normal(ks[10], (1, H), jnp.float32) * 0.1
    params = (w1, w2, w3, wg, bg, wn, bn)

    a_norm = gcn_norm_dense(edge_index, edge_attr, N)

    out = simple_poxel_gcn(a_norm, x, batch, params, B)
    out = jax.block_until_ready(out)
    assert out.shape == (B, H) and out.dtype == jnp.float32

    # Tight check against a reference using the kernel's exact operand quantization.
    operands = _prepare_operands(a_norm, x, batch, params)
    ref_kernel = ref_forward_kernel_path(operands, batch, B)
    assert jnp.allclose(out, ref_kernel, rtol=1e-2, atol=1e-2), (out, ref_kernel)

    # Looser check against the pure-f32 module semantics (bf16 matmul drift only).
    ref_f32 = ref_forward(a_norm, x, batch, params, B)
    assert jnp.allclose(out, ref_f32, rtol=5e-2, atol=5e-2), (out, ref_f32)

    print("KERNEL_OK")
</pallas_src>

<mosaic_0001>
module attributes {stable_mosaic.version = 11 : i64} {
  func.func @_poxel_gcn_kernel(%arg0: memref<64x64xbf16, #tpu.memory_space<vmem>>, %arg1: memref<64x32xf32, #tpu.memory_space<vmem>>, %arg2: memref<1x64xi32, #tpu.memory_space<vmem>>, %arg3: memref<4x32x32xbf16, #tpu.memory_space<vmem>>, %arg4: memref<1x32xbf16, #tpu.memory_space<vmem>>, %arg5: memref<1x32xf32, #tpu.memory_space<vmem>>, %arg6: memref<2x32xf32, #tpu.memory_space<vmem>>) attributes {dimension_semantics = [], scalar_prefetch = 0 : i64, scratch_operands = 0 : i64, tpu.core_type = #tpu.core_type<tc>} {
    %c0 = arith.constant 0 : index
    %c0_0 = arith.constant 0 : index
    %0 = vector.load %arg0[%c0, %c0_0] : memref<64x64xbf16, #tpu.memory_space<vmem>>, vector<64x64xbf16>
    %c0_1 = arith.constant 0 : index
    %c0_2 = arith.constant 0 : index
    %1 = vector.load %arg1[%c0_1, %c0_2] : memref<64x32xf32, #tpu.memory_space<vmem>>, vector<64x32xf32>
    %2 = arith.truncf %1 : vector<64x32xf32> to vector<64x32xbf16>
    %cst = arith.constant dense<0.000000e+00> : vector<64x32xf32>
    %3 = tpu.matmul %0, %2, %cst {dimension_numbers = #tpu.dot_dimension_numbers<[1], [0], [0], [1], [0, 0, 1, 1], [], []>} : vector<64x64xbf16>, vector<64x32xbf16>, vector<64x32xf32> -> vector<64x32xf32>
    %cst_3 = arith.constant 2.500000e-01 : f32
    %4 = vector.broadcast %cst_3 : f32 to vector<64x32xf32>
    %5 = arith.mulf %4, %1 : vector<64x32xf32>
    %6 = arith.addf %3, %5 : vector<64x32xf32>
    %7 = arith.truncf %6 : vector<64x32xf32> to vector<64x32xbf16>
    %c0_4 = arith.constant 0 : index
    %c0_5 = arith.constant 0 : index
    %c0_6 = arith.constant 0 : index
    %8 = vector.load %arg3[%c0_4, %c0_5, %c0_6] : memref<4x32x32xbf16, #tpu.memory_space<vmem>>, vector<1x32x32xbf16>
    %9 = vector.shape_cast %8 : vector<1x32x32xbf16> to vector<32x32xbf16>
    %cst_7 = arith.constant dense<0.000000e+00> : vector<64x32xf32>
    %10 = tpu.matmul %7, %9, %cst_7 {dimension_numbers = #tpu.dot_dimension_numbers<[1], [0], [0], [1], [0, 0, 1, 1], [], []>} : vector<64x32xbf16>, vector<32x32xbf16>, vector<64x32xf32> -> vector<64x32xf32>
    %cst_8 = arith.constant 0.000000e+00 : f32
    %11 = vector.broadcast %cst_8 : f32 to vector<64x32xf32>
    %12 = arith.maximumf %10, %11 : vector<64x32xf32>
    %13 = arith.truncf %12 : vector<64x32xf32> to vector<64x32xbf16>
    %cst_9 = arith.constant dense<0.000000e+00> : vector<64x32xf32>
    %14 = tpu.matmul %0, %13, %cst_9 {dimension_numbers = #tpu.dot_dimension_numbers<[1], [0], [0], [1], [0, 0, 1, 1], [], []>} : vector<64x64xbf16>, vector<64x32xbf16>, vector<64x32xf32> -> vector<64x32xf32>
    %cst_10 = arith.constant 2.500000e-01 : f32
    %15 = vector.broadcast %cst_10 : f32 to vector<64x32xf32>
    %16 = arith.mulf %15, %1 : vector<64x32xf32>
    %17 = arith.addf %14, %16 : vector<64x32xf32>
    %18 = arith.truncf %17 : vector<64x32xf32> to vector<64x32xbf16>
    %c1 = arith.constant 1 : index
    %c0_11 = arith.constant 0 : index
    %c0_12 = arith.constant 0 : index
    %19 = vector.load %arg3[%c1, %c0_11, %c0_12] : memref<4x32x32xbf16, #tpu.memory_space<vmem>>, vector<1x32x32xbf16>
    %20 = vector.shape_cast %19 : vector<1x32x32xbf16> to vector<32x32xbf16>
    %cst_13 = arith.constant dense<0.000000e+00> : vector<64x32xf32>
    %21 = tpu.matmul %18, %20, %cst_13 {dimension_numbers = #tpu.dot_dimension_numbers<[1], [0], [0], [1], [0, 0, 1, 1], [], []>} : vector<64x32xbf16>, vector<32x32xbf16>, vector<64x32xf32> -> vector<64x32xf32>
    %cst_14 = arith.constant 0.000000e+00 : f32
    %22 = vector.broadcast %cst_14 : f32 to vector<64x32xf32>
    %23 = arith.maximumf %21, %22 : vector<64x32xf32>
    %24 = arith.truncf %23 : vector<64x32xf32> to vector<64x32xbf16>
    %cst_15 = arith.constant dense<0.000000e+00> : vector<64x32xf32>
    %25 = tpu.matmul %0, %24, %cst_15 {dimension_numbers = #tpu.dot_dimension_numbers<[1], [0], [0], [1], [0, 0, 1, 1], [], []>} : vector<64x64xbf16>, vector<64x32xbf16>, vector<64x32xf32> -> vector<64x32xf32>
    %cst_16 = arith.constant 0.666666686 : f32
    %26 = vector.broadcast %cst_16 : f32 to vector<64x32xf32>
    %27 = arith.mulf %26, %1 : vector<64x32xf32>
    %28 = arith.addf %25, %27 : vector<64x32xf32>
    %29 = arith.truncf %28 : vector<64x32xf32> to vector<64x32xbf16>
    %c2 = arith.constant 2 : index
    %c0_17 = arith.constant 0 : index
    %c0_18 = arith.constant 0 : index
    %30 = vector.load %arg3[%c2, %c0_17, %c0_18] : memref<4x32x32xbf16, #tpu.memory_space<vmem>>, vector<1x32x32xbf16>
    %31 = vector.shape_cast %30 : vector<1x32x32xbf16> to vector<32x32xbf16>
    %cst_19 = arith.constant dense<0.000000e+00> : vector<64x32xf32>
    %32 = tpu.matmul %29, %31, %cst_19 {dimension_numbers = #tpu.dot_dimension_numbers<[1], [0], [0], [1], [0, 0, 1, 1], [], []>} : vector<64x32xbf16>, vector<32x32xbf16>, vector<64x32xf32> -> vector<64x32xf32>
    %cst_20 = arith.constant 0.000000e+00 : f32
    %33 = vector.broadcast %cst_20 : f32 to vector<64x32xf32>
    %34 = arith.maximumf %32, %33 : vector<64x32xf32>
    %35 = arith.truncf %34 : vector<64x32xf32> to vector<64x32xbf16>
    %c0_21 = arith.constant 0 : index
    %c0_22 = arith.constant 0 : index
    %36 = vector.load %arg4[%c0_21, %c0_22] : memref<1x32xbf16, #tpu.memory_space<vmem>>, vector<1x32xbf16>
    %cst_23 = arith.constant dense<0.000000e+00> : vector<1x64xf32>
    %37 = tpu.matmul %36, %35, %cst_23 {dimension_numbers = #tpu.dot_dimension_numbers<[1], [1], [0], [0], [0, 0, 1, 0], [], []>} : vector<1x32xbf16>, vector<64x32xbf16>, vector<1x64xf32> -> vector<1x64xf32>
    %c0_24 = arith.constant 0 : index
    %c0_25 = arith.constant 0 : index
    %38 = vector.load %arg2[%c0_24, %c0_25] : memref<1x64xi32, #tpu.memory_space<vmem>>, vector<1x64xi32>
    %39 = tpu.iota {dimensions = array<i32: 0>} : vector<2x64xi32>
    %40 = vector.broadcast %38 : vector<1x64xi32> to vector<2x64xi32>
    %41 = arith.cmpi eq, %39, %40 : vector<2x64xi32>
    %42 = arith.extui %41 : vector<2x64xi1> to vector<2x64xi32>
    %43 = arith.sitofp %42 : vector<2x64xi32> to vector<2x64xf32>
    %cst_26 = arith.constant -3.000000e+38 : f32
    %44 = vector.shape_cast %37 : vector<1x64xf32> to vector<1x64xf32>
    %45 = vector.broadcast %44 : vector<1x64xf32> to vector<2x64xf32>
    %46 = vector.broadcast %cst_26 : f32 to vector<2x64xf32>
    %47 = arith.select %41, %45, %46 : vector<2x64xi1>, vector<2x64xf32>
    %cst_27 = arith.constant dense<0xFF800000> : vector<2xf32>
    %48 = vector.multi_reduction <maximumf>, %47, %cst_27 [1] : vector<2x64xf32> to vector<2xf32>
    %49 = vector.shape_cast %48 : vector<2xf32> to vector<2x1xf32>
    %50 = vector.broadcast %37 : vector<1x64xf32> to vector<2x64xf32>
    %51 = vector.broadcast %49 : vector<2x1xf32> to vector<2x64xf32>
    %52 = arith.subf %50, %51 : vector<2x64xf32>
    %cst_28 = arith.constant 0.000000e+00 : f32
    %53 = vector.broadcast %cst_28 : f32 to vector<2x64xf32>
    %54 = arith.select %41, %52, %53 : vector<2x64xi1>, vector<2x64xf32>
    %55 = math.exp %54 : vector<2x64xf32>
    %56 = arith.mulf %43, %55 : vector<2x64xf32>
    %cst_29 = arith.constant dense<0.000000e+00> : vector<2xf32>
    %57 = vector.multi_reduction <add>, %56, %cst_29 [1] : vector<2x64xf32> to vector<2xf32>
    %58 = vector.shape_cast %57 : vector<2xf32> to vector<2x1xf32>
    %cst_30 = arith.constant 1.000000e-30 : f32
    %59 = vector.broadcast %cst_30 : f32 to vector<2x1xf32>
    %60 = arith.maximumf %58, %59 : vector<2x1xf32>
    %61 = tpu.reciprocal %60 {approx = true} : vector<2x1xf32> -> vector<2x1xf32>
    %62 = vector.broadcast %61 : vector<2x1xf32> to vector<2x64xf32>
    %63 = arith.mulf %56, %62 : vector<2x64xf32>
    %cst_31 = arith.constant dense<0.000000e+00> : vector<2x32xf32>
    %64 = tpu.matmul %63, %34, %cst_31 {dimension_numbers = #tpu.dot_dimension_numbers<[1], [0], [0], [1], [0, 0, 1, 1], [], []>} : vector<2x64xf32>, vector<64x32xf32>, vector<2x32xf32> -> vector<2x32xf32>
    %65 = arith.truncf %64 : vector<2x32xf32> to vector<2x32xbf16>
    %c3 = arith.constant 3 : index
    %c0_32 = arith.constant 0 : index
    %c0_33 = arith.constant 0 : index
    %66 = vector.load %arg3[%c3, %c0_32, %c0_33] : memref<4x32x32xbf16, #tpu.memory_space<vmem>>, vector<1x32x32xbf16>
    %67 = vector.shape_cast %66 : vector<1x32x32xbf16> to vector<32x32xbf16>
    %cst_34 = arith.constant dense<0.000000e+00> : vector<2x32xf32>
    %68 = tpu.matmul %65, %67, %cst_34 {dimension_numbers = #tpu.dot_dimension_numbers<[1], [0], [0], [1], [0, 0, 1, 1], [], []>} : vector<2x32xbf16>, vector<32x32xbf16>, vector<2x32xf32> -> vector<2x32xf32>
    %c0_35 = arith.constant 0 : index
    %c0_36 = arith.constant 0 : index
    %69 = vector.load %arg5[%c0_35, %c0_36] : memref<1x32xf32, #tpu.memory_space<vmem>>, vector<1x32xf32>
    %70 = vector.broadcast %69 : vector<1x32xf32> to vector<2x32xf32>
    %71 = arith.addf %68, %70 : vector<2x32xf32>
    %c0_37 = arith.constant 0 : index
    %c0_38 = arith.constant 0 : index
    %72 = vector.load %arg6[%c0_37, %c0_38] : memref<2x32xf32, #tpu.memory_space<vmem>>, vector<2x32xf32>
    tpu.vector_store %arg6[%c0_37, %c0_38], %71 {strides = array<i32>} : memref<2x32xf32, #tpu.memory_space<vmem>>, vector<2x32xf32>,
    return
  }
}

</mosaic_0001>

<llo_original>
// kernel: tpu_custom_call.1
$region0: #{tpu_custom_call.1}
  #allocation0 [shape = 'u32[]', space=smem, size = 0x4, offset = 0x4, fixed_abs, tag = 'smem constant byte address 0x4 - core index']
  #allocation1 [shape = 'u32[144,128]{1,0:T(1,128)}', space=vmem, size = 0x12000, scoped, tag = 'internal scratch']
  %s0 = inlined_call_operand.vmem [shape: bf16[64,64], index: 0, kind: input, shape index: {}]
  %s1 = inlined_call_operand.vmem [shape: f32[64,32], index: 1, kind: input, shape index: {}]
  %s2 = inlined_call_operand.vmem [shape: s32[1,64], index: 2, kind: input, shape index: {}]
  %s3 = inlined_call_operand.vmem [shape: bf16[4,32,32], index: 3, kind: input, shape index: {}]
  %s4 = inlined_call_operand.vmem [shape: bf16[1,32], index: 4, kind: input, shape index: {}]
  %s5 = inlined_call_operand.vmem [shape: f32[1,32], index: 5, kind: input, shape index: {}]
  %s6 = inlined_call_operand.hbm [shape: f32[2,32], index: 6, kind: output, shape index: {}]
  %s7 = sld [smem:[#allocation0]]
  $region34: #{tpu_custom_call.1} parent=0
    _
  %s9 = ssub.s32 1, %s7
  %s10 = scalar_select 0, %s9, %s7
  $region1: #{tpu_custom_call.1} parent=0
    #allocation2 [shape = 'u8[1024]{0}', space=vmem, size = 0x400, scoped, tag = 'output window, operand 0, single buffered']
    #allocation3 [shape = 's32[1]{0}', space=sflag, size = 0x4, scoped, tag = 'scoped memory for tpu_custom_call.1']
    %11 = vsyncpa [#allocation3], 0
    // Predicated region
    $region2: #{tpu_custom_call.1} parent=1 // pred_check
      _
    $region3: #{tpu_custom_call.1} parent=1 // pred_check_branch
      %13 = sbr.rel (0) target = $region5
    $region4: #{tpu_custom_call.1} parent=1 // pred_region
      _
    $region5: #{tpu_custom_call.1} parent=1 // pred_fallthru
      _
    // Predicated region
    $region6: #{tpu_custom_call.1} parent=1 // pred_check
      _
    $region7: #{tpu_custom_call.1} parent=1 // pred_check_branch
      %15 = sbr.rel (0) target = $region9
    $region8: #{tpu_custom_call.1} parent=1 // pred_region
      _
    $region9: #{tpu_custom_call.1} parent=1 // pred_fallthru
      _
    // Predicated region
    $region10: #{tpu_custom_call.1} parent=1 // pred_check
      _
    $region11: #{tpu_custom_call.1} parent=1 // pred_check_branch
      %17 = sbr.rel (0) target = $region13
    $region12: #{tpu_custom_call.1} parent=1 // pred_region
      _
    $region13: #{tpu_custom_call.1} parent=1 // pred_fallthru
      _
    // Predicated region
    $region14: #{tpu_custom_call.1} parent=1 // pred_check
      _
    $region15: #{tpu_custom_call.1} parent=1 // pred_check_branch
      %19 = sbr.rel (0) target = $region17
    $region16: #{tpu_custom_call.1} parent=1 // pred_region
      _
    $region17: #{tpu_custom_call.1} parent=1 // pred_fallthru
      _
    // Predicated region
    $region18: #{tpu_custom_call.1} parent=1 // pred_check
      _
    $region19: #{tpu_custom_call.1} parent=1 // pred_check_branch
      %21 = sbr.rel (0) target = $region21
    $region20: #{tpu_custom_call.1} parent=1 // pred_region
      _
    $region21: #{tpu_custom_call.1} parent=1 // pred_fallthru
      _
    // Predicated region
    $region22: #{tpu_custom_call.1} parent=1 // pred_check
      _
    $region23: #{tpu_custom_call.1} parent=1 // pred_check_branch
      %23 = sbr.rel (0) target = $region25
    $region24: #{tpu_custom_call.1} parent=1 // pred_region
      _
    $region25: #{tpu_custom_call.1} parent=1 // pred_fallthru
      _
    %v25 = vld [vmem:[%s0] sm:$0xf]
    %v26 = vld [vmem:[%s0 + $0x4] sm:$0xf]
    %v27 = vld [vmem:[%s0 + $0x8] sm:$0xf]
    %v28 = vld [vmem:[%s0 + $0xc] sm:$0xf]
    %v29 = vld [vmem:[%s0 + $0x10] sm:$0xf]
    %v30 = vld [vmem:[%s0 + $0x14] sm:$0xf]
    %v31 = vld [vmem:[%s0 + $0x18] sm:$0xf]
    %v32 = vld [vmem:[%s0 + $0x1c] sm:$0xf]
    %v33 = vld [vmem:[%s1] sm:$0xff]
    %v34 = vld [vmem:[%s1 + $0x8] sm:$0xff]
    %v35 = vld [vmem:[%s1 + $0x10] sm:$0xff]
    %v36 = vld [vmem:[%s1 + $0x18] sm:$0xff]
    %v37 = vld [vmem:[%s1 + $0x20] sm:$0xff]
    %v38 = vld [vmem:[%s1 + $0x28] sm:$0xff]
    %v39 = vld [vmem:[%s1 + $0x30] sm:$0xff]
    %v40 = vld [vmem:[%s1 + $0x38] sm:$0xff]
    %v41 = vpack.c.bf16 %v34, %v33
    %v42 = vpack.c.bf16 %v36, %v35
    %v43 = vpack.c.bf16 %v38, %v37
    %v44 = vpack.c.bf16 %v40, %v39
    %v45 = vmul.f32 %v33, 0.25
    %v46 = vmul.f32 %v34, 0.25
    %v47 = vmul.f32 %v35, 0.25
    %v48 = vmul.f32 %v36, 0.25
    %v49 = vmul.f32 %v37, 0.25
    %v50 = vmul.f32 %v38, 0.25
    %v51 = vmul.f32 %v39, 0.25
    %v52 = vmul.f32 %v40, 0.25
    %v61 = vunpack.c.l.b16 %v25
    %v62 = vunpack.c.l.b16 %v26
    %v63 = vunpack.c.l.b16 %v27
    %v64 = vunpack.c.l.b16 %v28
    %v65 = vunpack.c.l.b16 %v29
    %v66 = vunpack.c.l.b16 %v30
    %v67 = vunpack.c.l.b16 %v31
    %v68 = vunpack.c.l.b16 %v32
    %v69 = vpack.c.b16 %v62, %v61
    %v70 = vpack.c.b16 %v64, %v63
    %v71 = vpack.c.b16 %v66, %v65
    %v72 = vpack.c.b16 %v68, %v67
    %vm73 = vcmask 523264
    %v75 = vsel %vm73, %v69, 0
    %v78 = vsel %vm73, %v70, 0
    %v81 = vsel %vm73, %v71, 0
    %v84 = vsel %vm73, %v72, 0
    %86 = vmatprep.subr.bf16.mxu0 0
    %87 = vmatpush1.bf16.msra.mxu0 %v41
    %88 = vmatprep.subr.bf16.mxu0 0
    %89 = vmatpush1.bf16.msra.mxu0 %v42
    %90 = vmatprep.subr.bf16.mxu0 0
    %91 = vmatpush1.bf16.msra.mxu0 %v43
    %92 = vmatprep.subr.bf16.mxu0 0
    %93 = vmatpush1.bf16.msra.mxu0 %v44
    %94 = vmatprep.subr.bf16.mxu0 0
    %95 = vmatpush1.bf16.msra.mxu0 0
    %96 = vmatprep.subr.bf16.mxu0 0
    %97 = vmatpush1.bf16.msra.mxu0 0
    %98 = vmatprep.subr.bf16.mxu0 0
    %99 = vmatpush1.bf16.msra.mxu0 0
    %100 = vmatprep.subr.bf16.mxu0 0
    %101 = vmatpush1.bf16.msra.mxu0 0
    %102 = vmatprep.subr.bf16.mxu0 0
    %103 = vmatpush1.bf16.msra.mxu0 0
    %104 = vmatprep.subr.bf16.mxu0 0
    %105 = vmatpush1.bf16.msra.mxu0 0
    %106 = vmatprep.subr.bf16.mxu0 0
    %107 = vmatpush1.bf16.msra.mxu0 0
    %108 = vmatprep.subr.bf16.mxu0 0
    %109 = vmatpush1.bf16.msra.mxu0 0
    %110 = vmatprep.subr.bf16.mxu0 0
    %111 = vmatpush1.bf16.msra.mxu0 0
    %112 = vmatprep.subr.bf16.mxu0 0
    %113 = vmatpush1.bf16.msra.mxu0 0
    %114 = vmatprep.subr.bf16.mxu0 0
    %115 = vmatpush1.bf16.msra.mxu0 0
    %116 = vmatprep.subr.bf16.mxu0 0
    %117 = vmatpush1.bf16.msra.mxu0 0
    %118 = vmatprep.mubr.bf16.mxu0 0
    %119 = vmatmul.mubr.bf16.gmra.mrb[0].mxu0 %v75
    %v120 = vpop.f32.mrb[0].mxu0
    %v121 = vadd.f32 %v45, %v120
    %v122 = vpop.f32.mrb[0].mxu0
    %v123 = vpop.f32.mrb[0].mxu0
    %v124 = vadd.f32 %v46, %v123
    %v125 = vpop.f32.mrb[0].mxu0
    %126 = vmatprep.mubr.bf16.mxu0 0
    %127 = vmatmul.mubr.bf16.gmra.mrb[0].mxu0 %v78
    %v128 = vpop.f32.mrb[0].mxu0
    %v129 = vadd.f32 %v47, %v128
    %v130 = vpop.f32.mrb[0].mxu0
    %v131 = vpop.f32.mrb[0].mxu0
    %v132 = vadd.f32 %v48, %v131
    %v133 = vpop.f32.mrb[0].mxu0
    %134 = vmatprep.mubr.bf16.mxu0 0
    %135 = vmatmul.mubr.bf16.gmra.mrb[0].mxu0 %v81
    %v136 = vpop.f32.mrb[0].mxu0
    %v137 = vadd.f32 %v49, %v136
    %v138 = vpop.f32.mrb[0].mxu0
    %v139 = vpop.f32.mrb[0].mxu0
    %v140 = vadd.f32 %v50, %v139
    %v141 = vpop.f32.mrb[0].mxu0
    %142 = vmatprep.mubr.bf16.mxu0 0
    %143 = vmatmul.mubr.bf16.gmra.mrb[0].mxu0 %v84
    %v144 = vpop.f32.mrb[0].mxu0
    %v145 = vadd.f32 %v51, %v144
    %v146 = vpop.f32.mrb[0].mxu0
    %v147 = vpop.f32.mrb[0].mxu0
    %v148 = vadd.f32 %v52, %v147
    %v149 = vpop.f32.mrb[0].mxu0
    %150 = vdwg.mxu0
    %v151 = vpack.c.bf16 %v124, %v121
    %v152 = vpack.c.bf16 %v132, %v129
    %v153 = vpack.c.bf16 %v140, %v137
    %v154 = vpack.c.bf16 %v148, %v145
    %v155 = vld [vmem:[%s3] sm:$0xf]
    %v156 = vld [vmem:[%s3 + $0x4] sm:$0xf]
    %v157 = vld [vmem:[%s3 + $0x8] sm:$0xf]
    %v158 = vld [vmem:[%s3 + $0xc] sm:$0xf]
    %v163 = vunpack.c.l.b16 %v155
    %v164 = vunpack.c.l.b16 %v156
    %v165 = vunpack.c.l.b16 %v157
    %v166 = vunpack.c.l.b16 %v158
    %v167 = vpack.c.b16 %v164, %v163
    %v168 = vpack.c.b16 %v166, %v165
    %vm171 = vcmask 261120
    %v173 = vsel %vm171, %v151, 0
    %v176 = vsel %vm171, %v152, 0
    %v179 = vsel %vm171, %v153, 0
    %v182 = vsel %vm171, %v154, 0
    %184 = vmatprep.subr.bf16.mxu0 0
    %185 = vmatpush1.bf16.msra.mxu0 %v167
    %186 = vmatprep.subr.bf16.mxu0 0
    %187 = vmatpush1.bf16.msra.mxu0 %v168
    %188 = vmatprep.subr.bf16.mxu0 0
    %189 = vmatpush1.bf16.msra.mxu0 0
    %190 = vmatprep.subr.bf16.mxu0 0
    %191 = vmatpush1.bf16.msra.mxu0 0
    %192 = vmatprep.subr.bf16.mxu0 0
    %193 = vmatpush1.bf16.msra.mxu0 0
    %194 = vmatprep.subr.bf16.mxu0 0
    %195 = vmatpush1.bf16.msra.mxu0 0
    %196 = vmatprep.subr.bf16.mxu0 0
    %197 = vmatpush1.bf16.msra.mxu0 0
    %198 = vmatprep.subr.bf16.mxu0 0
    %199 = vmatpush1.bf16.msra.mxu0 0
    %200 = vmatprep.subr.bf16.mxu0 0
    %201 = vmatpush1.bf16.msra.mxu0 0
    %202 = vmatprep.subr.bf16.mxu0 0
    %203 = vmatpush1.bf16.msra.mxu0 0
    %204 = vmatprep.subr.bf16.mxu0 0
    %205 = vmatpush1.bf16.msra.mxu0 0
    %206 = vmatprep.subr.bf16.mxu0 0
    %207 = vmatpush1.bf16.msra.mxu0 0
    %208 = vmatprep.subr.bf16.mxu0 0
    %209 = vmatpush1.bf16.msra.mxu0 0
    %210 = vmatprep.subr.bf16.mxu0 0
    %211 = vmatpush1.bf16.msra.mxu0 0
    %212 = vmatprep.subr.bf16.mxu0 0
    %213 = vmatpush1.bf16.msra.mxu0 0
    %214 = vmatprep.subr.bf16.mxu0 0
    %215 = vmatpush1.bf16.msra.mxu0 0
    %216 = vmatprep.mubr.bf16.mxu0 0
    %217 = vmatmul.mubr.bf16.gmra.mrb[0].mxu0 %v173
    %v218 = vpop.f32.mrb[0].mxu0
    %v219 = vadd.f32 0.0, %v218
    %v220 = vpop.f32.mrb[0].mxu0
    %v221 = vpop.f32.mrb[0].mxu0
    %v222 = vadd.f32 0.0, %v221
    %v223 = vpop.f32.mrb[0].mxu0
    %224 = vmatprep.mubr.bf16.mxu0 0
    %225 = vmatmul.mubr.bf16.gmra.mrb[0].mxu0 %v176
    %v226 = vpop.f32.mrb[0].mxu0
    %v227 = vadd.f32 0.0, %v226
    %v228 = vpop.f32.mrb[0].mxu0
    %v229 = vpop.f32.mrb[0].mxu0
    %v230 = vadd.f32 0.0, %v229
    %v231 = vpop.f32.mrb[0].mxu0
    %232 = vmatprep.mubr.bf16.mxu0 0
    %233 = vmatmul.mubr.bf16.gmra.mrb[0].mxu0 %v179
    %v234 = vpop.f32.mrb[0].mxu0
    %v235 = vadd.f32 0.0, %v234
    %v236 = vpop.f32.mrb[0].mxu0
    %v237 = vpop.f32.mrb[0].mxu0
    %v238 = vadd.f32 0.0, %v237
    %v239 = vpop.f32.mrb[0].mxu0
    %240 = vmatprep.mubr.bf16.mxu0 0
    %241 = vmatmul.mubr.bf16.gmra.mrb[0].mxu0 %v182
    %v242 = vpop.f32.mrb[0].mxu0
    %v243 = vadd.f32 0.0, %v242
    %v244 = vpop.f32.mrb[0].mxu0
    %v245 = vpop.f32.mrb[0].mxu0
    %v246 = vadd.f32 0.0, %v245
    %v247 = vpop.f32.mrb[0].mxu0
    %248 = vdwg.mxu0
    %v249 = vmax.f32 %v219, 0.0
    %v250 = vmax.f32 %v222, 0.0
    %v251 = vmax.f32 %v227, 0.0
    %v252 = vmax.f32 %v230, 0.0
    %v253 = vmax.f32 %v235, 0.0
    %v254 = vmax.f32 %v238, 0.0
    %v255 = vmax.f32 %v243, 0.0
    %v256 = vmax.f32 %v246, 0.0
    %v257 = vpack.c.bf16 %v250, %v249
    %v258 = vpack.c.bf16 %v252, %v251
    %v259 = vpack.c.bf16 %v254, %v253
    %v260 = vpack.c.bf16 %v256, %v255
    %261 = vmatprep.subr.bf16.mxu0 0
    %262 = vmatpush1.bf16.msra.mxu0 %v257
    %263 = vmatprep.subr.bf16.mxu0 0
    %264 = vmatpush1.bf16.msra.mxu0 %v258
    %265 = vmatprep.subr.bf16.mxu0 0
    %266 = vmatpush1.bf16.msra.mxu0 %v259
    %267 = vmatprep.subr.bf16.mxu0 0
    %268 = vmatpush1.bf16.msra.mxu0 %v260
    %269 = vmatprep.subr.bf16.mxu0 0
    %270 = vmatpush1.bf16.msra.mxu0 0
    %271 = vmatprep.subr.bf16.mxu0 0
    %272 = vmatpush1.bf16.msra.mxu0 0
    %273 = vmatprep.subr.bf16.mxu0 0
    %274 = vmatpush1.bf16.msra.mxu0 0
    %275 = vmatprep.subr.bf16.mxu0 0
    %276 = vmatpush1.bf16.msra.mxu0 0
    %277 = vmatprep.subr.bf16.mxu0 0
    %278 = vmatpush1.bf16.msra.mxu0 0
    %279 = vmatprep.subr.bf16.mxu0 0
    %280 = vmatpush1.bf16.msra.mxu0 0
    %281 = vmatprep.subr.bf16.mxu0 0
    %282 = vmatpush1.bf16.msra.mxu0 0
    %283 = vmatprep.subr.bf16.mxu0 0
    %284 = vmatpush1.bf16.msra.mxu0 0
    %285 = vmatprep.subr.bf16.mxu0 0
    %286 = vmatpush1.bf16.msra.mxu0 0
    %287 = vmatprep.subr.bf16.mxu0 0
    %288 = vmatpush1.bf16.msra.mxu0 0
    %289 = vmatprep.subr.bf16.mxu0 0
    %290 = vmatpush1.bf16.msra.mxu0 0
    %291 = vmatprep.subr.bf16.mxu0 0
    %292 = vmatpush1.bf16.msra.mxu0 0
    %293 = vmatprep.mubr.bf16.mxu0 0
    %294 = vmatmul.mubr.bf16.gmra.mrb[0].mxu0 %v75
    %v295 = vpop.f32.mrb[0].mxu0
    %v296 = vadd.f32 %v45, %v295
    %v297 = vpop.f32.mrb[0].mxu0
    %v298 = vpop.f32.mrb[0].mxu0
    %v299 = vadd.f32 %v46, %v298
    %v300 = vpop.f32.mrb[0].mxu0
    %301 = vmatprep.mubr.bf16.mxu0 0
    %302 = vmatmul.mubr.bf16.gmra.mrb[0].mxu0 %v78
    %v303 = vpop.f32.mrb[0].mxu0
    %v304 = vadd.f32 %v47, %v303
    %v305 = vpop.f32.mrb[0].mxu0
    %v306 = vpop.f32.mrb[0].mxu0
    %v307 = vadd.f32 %v48, %v306
    %v308 = vpop.f32.mrb[0].mxu0
    %309 = vmatprep.mubr.bf16.mxu0 0
    %310 = vmatmul.mubr.bf16.gmra.mrb[0].mxu0 %v81
    %v311 = vpop.f32.mrb[0].mxu0
    %v312 = vadd.f32 %v49, %v311
    %v313 = vpop.f32.mrb[0].mxu0
    %v314 = vpop.f32.mrb[0].mxu0
    %v315 = vadd.f32 %v50, %v314
    %v316 = vpop.f32.mrb[0].mxu0
    %317 = vmatprep.mubr.bf16.mxu0 0
    %318 = vmatmul.mubr.bf16.gmra.mrb[0].mxu0 %v84
    %v319 = vpop.f32.mrb[0].mxu0
    %v320 = vadd.f32 %v51, %v319
    %v321 = vpop.f32.mrb[0].mxu0
    %v322 = vpop.f32.mrb[0].mxu0
    %v323 = vadd.f32 %v52, %v322
    %v324 = vpop.f32.mrb[0].mxu0
    %325 = vdwg.mxu0
    %v326 = vpack.c.bf16 %v299, %v296
    %v327 = vpack.c.bf16 %v307, %v304
    %v328 = vpack.c.bf16 %v315, %v312
    %v329 = vpack.c.bf16 %v323, %v320
    %s330 = scalar_lea.vmem %s3, 16
    %v331 = vld [vmem:[%s330] sm:$0xf]
    %v332 = vld [vmem:[%s330 + $0x4] sm:$0xf]
    %v333 = vld [vmem:[%s330 + $0x8] sm:$0xf]
    %v334 = vld [vmem:[%s330 + $0xc] sm:$0xf]
    %v339 = vunpack.c.l.b16 %v331
    %v340 = vunpack.c.l.b16 %v332
    %v341 = vunpack.c.l.b16 %v333
    %v342 = vunpack.c.l.b16 %v334
    %v343 = vpack.c.b16 %v340, %v339
    %v344 = vpack.c.b16 %v342, %v341
    %v348 = vsel %vm171, %v326, 0
    %v351 = vsel %vm171, %v327, 0
    %v354 = vsel %vm171, %v328, 0
    %v357 = vsel %vm171, %v329, 0
    %359 = vmatprep.subr.bf16.mxu0 0
    %360 = vmatpush1.bf16.msra.mxu0 %v343
    %361 = vmatprep.subr.bf16.mxu0 0
    %362 = vmatpush1.bf16.msra.mxu0 %v344
    %363 = vmatprep.subr.bf16.mxu0 0
    %364 = vmatpush1.bf16.msra.mxu0 0
    %365 = vmatprep.subr.bf16.mxu0 0
    %366 = vmatpush1.bf16.msra.mxu0 0
    %367 = vmatprep.subr.bf16.mxu0 0
    %368 = vmatpush1.bf16.msra.mxu0 0
    %369 = vmatprep.subr.bf16.mxu0 0
    %370 = vmatpush1.bf16.msra.mxu0 0
    %371 = vmatprep.subr.bf16.mxu0 0
    %372 = vmatpush1.bf16.msra.mxu0 0
    %373 = vmatprep.subr.bf16.mxu0 0
    %374 = vmatpush1.bf16.msra.mxu0 0
    %375 = vmatprep.subr.bf16.mxu0 0
    %376 = vmatpush1.bf16.msra.mxu0 0
    %377 = vmatprep.subr.bf16.mxu0 0
    %378 = vmatpush1.bf16.msra.mxu0 0
    %379 = vmatprep.subr.bf16.mxu0 0
    %380 = vmatpush1.bf16.msra.mxu0 0
    %381 = vmatprep.subr.bf16.mxu0 0
    %382 = vmatpush1.bf16.msra.mxu0 0
    %383 = vmatprep.subr.bf16.mxu0 0
    %384 = vmatpush1.bf16.msra.mxu0 0
    %385 = vmatprep.subr.bf16.mxu0 0
    %386 = vmatpush1.bf16.msra.mxu0 0
    %387 = vmatprep.subr.bf16.mxu0 0
    %388 = vmatpush1.bf16.msra.mxu0 0
    %389 = vmatprep.subr.bf16.mxu0 0
    %390 = vmatpush1.bf16.msra.mxu0 0
    %391 = vmatprep.mubr.bf16.mxu0 0
    %392 = vmatmul.mubr.bf16.gmra.mrb[0].mxu0 %v348
    %v393 = vpop.f32.mrb[0].mxu0
    %v394 = vadd.f32 0.0, %v393
    %v395 = vpop.f32.mrb[0].mxu0
    %v396 = vpop.f32.mrb[0].mxu0
    %v397 = vadd.f32 0.0, %v396
    %v398 = vpop.f32.mrb[0].mxu0
    %399 = vmatprep.mubr.bf16.mxu0 0
    %400 = vmatmul.mubr.bf16.gmra.mrb[0].mxu0 %v351
    %v401 = vpop.f32.mrb[0].mxu0
    %v402 = vadd.f32 0.0, %v401
    %v403 = vpop.f32.mrb[0].mxu0
    %v404 = vpop.f32.mrb[0].mxu0
    %v405 = vadd.f32 0.0, %v404
    %v406 = vpop.f32.mrb[0].mxu0
    %407 = vmatprep.mubr.bf16.mxu0 0
    %408 = vmatmul.mubr.bf16.gmra.mrb[0].mxu0 %v354
    %v409 = vpop.f32.mrb[0].mxu0
    %v410 = vadd.f32 0.0, %v409
    %v411 = vpop.f32.mrb[0].mxu0
    %v412 = vpop.f32.mrb[0].mxu0
    %v413 = vadd.f32 0.0, %v412
    %v414 = vpop.f32.mrb[0].mxu0
    %415 = vmatprep.mubr.bf16.mxu0 0
    %416 = vmatmul.mubr.bf16.gmra.mrb[0].mxu0 %v357
    %v417 = vpop.f32.mrb[0].mxu0
    %v418 = vadd.f32 0.0, %v417
    %v419 = vpop.f32.mrb[0].mxu0
    %v420 = vpop.f32.mrb[0].mxu0
    %v421 = vadd.f32 0.0, %v420
    %v422 = vpop.f32.mrb[0].mxu0
    %423 = vdwg.mxu0
    %v424 = vmax.f32 %v394, 0.0
    %v425 = vmax.f32 %v397, 0.0
    %v426 = vmax.f32 %v402, 0.0
    %v427 = vmax.f32 %v405, 0.0
    %v428 = vmax.f32 %v410, 0.0
    %v429 = vmax.f32 %v413, 0.0
    %v430 = vmax.f32 %v418, 0.0
    %v431 = vmax.f32 %v421, 0.0
    %v432 = vpack.c.bf16 %v425, %v424
    %v433 = vpack.c.bf16 %v427, %v426
    %v434 = vpack.c.bf16 %v429, %v428
    %v435 = vpack.c.bf16 %v431, %v430
    %v436 = vmul.f32 %v33, 0.6666667
    %v437 = vmul.f32 %v34, 0.6666667
    %v438 = vmul.f32 %v35, 0.6666667
    %v439 = vmul.f32 %v36, 0.6666667
    %v440 = vmul.f32 %v37, 0.6666667
    %v441 = vmul.f32 %v38, 0.6666667
    %v442 = vmul.f32 %v39, 0.6666667
    %v443 = vmul.f32 %v40, 0.6666667
    %444 = vmatprep.subr.bf16.mxu0 0
    %445 = vmatpush1.bf16.msra.mxu0 %v432
    %446 = vmatprep.subr.bf16.mxu0 0
    %447 = vmatpush1.bf16.msra.mxu0 %v433
    %448 = vmatprep.subr.bf16.mxu0 0
    %449 = vmatpush1.bf16.msra.mxu0 %v434
    %450 = vmatprep.subr.bf16.mxu0 0
    %451 = vmatpush1.bf16.msra.mxu0 %v435
    %452 = vmatprep.subr.bf16.mxu0 0
    %453 = vmatpush1.bf16.msra.mxu0 0
    %454 = vmatprep.subr.bf16.mxu0 0
    %455 = vmatpush1.bf16.msra.mxu0 0
    %456 = vmatprep.subr.bf16.mxu0 0
    %457 = vmatpush1.bf16.msra.mxu0 0
    %458 = vmatprep.subr.bf16.mxu0 0
    %459 = vmatpush1.bf16.msra.mxu0 0
    %460 = vmatprep.subr.bf16.mxu0 0
    %461 = vmatpush1.bf16.msra.mxu0 0
    %462 = vmatprep.subr.bf16.mxu0 0
    %463 = vmatpush1.bf16.msra.mxu0 0
    %464 = vmatprep.subr.bf16.mxu0 0
    %465 = vmatpush1.bf16.msra.mxu0 0
    %466 = vmatprep.subr.bf16.mxu0 0
    %467 = vmatpush1.bf16.msra.mxu0 0
    %468 = vmatprep.subr.bf16.mxu0 0
    %469 = vmatpush1.bf16.msra.mxu0 0
    %470 = vmatprep.subr.bf16.mxu0 0
    %471 = vmatpush1.bf16.msra.mxu0 0
    %472 = vmatprep.subr.bf16.mxu0 0
    %473 = vmatpush1.bf16.msra.mxu0 0
    %474 = vmatprep.subr.bf16.mxu0 0
    %475 = vmatpush1.bf16.msra.mxu0 0
    %476 = vmatprep.mubr.bf16.mxu0 0
    %477 = vmatmul.mubr.bf16.gmra.mrb[0].mxu0 %v75
    %v478 = vpop.f32.mrb[0].mxu0
    %v479 = vadd.f32 %v436, %v478
    %v480 = vpop.f32.mrb[0].mxu0
    %v481 = vpop.f32.mrb[0].mxu0
    %v482 = vadd.f32 %v437, %v481
    %v483 = vpop.f32.mrb[0].mxu0
    %484 = vmatprep.mubr.bf16.mxu0 0
    %485 = vmatmul.mubr.bf16.gmra.mrb[0].mxu0 %v78
    %v486 = vpop.f32.mrb[0].mxu0
    %v487 = vadd.f32 %v438, %v486
    %v488 = vpop.f32.mrb[0].mxu0
    %v489 = vpop.f32.mrb[0].mxu0
    %v490 = vadd.f32 %v439, %v489
    %v491 = vpop.f32.mrb[0].mxu0
    %492 = vmatprep.mubr.bf16.mxu0 0
    %493 = vmatmul.mubr.bf16.gmra.mrb[0].mxu0 %v81
    %v494 = vpop.f32.mrb[0].mxu0
    %v495 = vadd.f32 %v440, %v494
    %v496 = vpop.f32.mrb[0].mxu0
    %v497 = vpop.f32.mrb[0].mxu0
    %v498 = vadd.f32 %v441, %v497
    %v499 = vpop.f32.mrb[0].mxu0
    %500 = vmatprep.mubr.bf16.mxu0 0
    %501 = vmatmul.mubr.bf16.gmra.mrb[0].mxu0 %v84
    %v502 = vpop.f32.mrb[0].mxu0
    %v503 = vadd.f32 %v442, %v502
    %v504 = vpop.f32.mrb[0].mxu0
    %v505 = vpop.f32.mrb[0].mxu0
    %v506 = vadd.f32 %v443, %v505
    %v507 = vpop.f32.mrb[0].mxu0
    %508 = vdwg.mxu0
    %v509 = vpack.c.bf16 %v482, %v479
    %v510 = vpack.c.bf16 %v490, %v487
    %v511 = vpack.c.bf16 %v498, %v495
    %v512 = vpack.c.bf16 %v506, %v503
    %s513 = scalar_lea.vmem %s3, 32
    %v514 = vld [vmem:[%s513] sm:$0xf]
    %v515 = vld [vmem:[%s513 + $0x4] sm:$0xf]
    %v516 = vld [vmem:[%s513 + $0x8] sm:$0xf]
    %v517 = vld [vmem:[%s513 + $0xc] sm:$0xf]
    %v522 = vunpack.c.l.b16 %v514
    %v523 = vunpack.c.l.b16 %v515
    %v524 = vunpack.c.l.b16 %v516
    %v525 = vunpack.c.l.b16 %v517
    %v526 = vpack.c.b16 %v523, %v522
    %v527 = vpack.c.b16 %v525, %v524
    %v531 = vsel %vm171, %v509, 0
    %v534 = vsel %vm171, %v510, 0
    %v537 = vsel %vm171, %v511, 0
    %v540 = vsel %vm171, %v512, 0
    %542 = vmatprep.subr.bf16.mxu0 0
    %543 = vmatpush1.bf16.msra.mxu0 %v526
    %544 = vmatprep.subr.bf16.mxu0 0
    %545 = vmatpush1.bf16.msra.mxu0 %v527
    %546 = vmatprep.subr.bf16.mxu0 0
    %547 = vmatpush1.bf16.msra.mxu0 0
    %548 = vmatprep.subr.bf16.mxu0 0
    %549 = vmatpush1.bf16.msra.mxu0 0
    %550 = vmatprep.subr.bf16.mxu0 0
    %551 = vmatpush1.bf16.msra.mxu0 0
    %552 = vmatprep.subr.bf16.mxu0 0
    %553 = vmatpush1.bf16.msra.mxu0 0
    %554 = vmatprep.subr.bf16.mxu0 0
    %555 = vmatpush1.bf16.msra.mxu0 0
    %556 = vmatprep.subr.bf16.mxu0 0
    %557 = vmatpush1.bf16.msra.mxu0 0
    %558 = vmatprep.subr.bf16.mxu0 0
    %559 = vmatpush1.bf16.msra.mxu0 0
    %560 = vmatprep.subr.bf16.mxu0 0
    %561 = vmatpush1.bf16.msra.mxu0 0
    %562 = vmatprep.subr.bf16.mxu0 0
    %563 = vmatpush1.bf16.msra.mxu0 0
    %564 = vmatprep.subr.bf16.mxu0 0
    %565 = vmatpush1.bf16.msra.mxu0 0
    %566 = vmatprep.subr.bf16.mxu0 0
    %567 = vmatpush1.bf16.msra.mxu0 0
    %568 = vmatprep.subr.bf16.mxu0 0
    %569 = vmatpush1.bf16.msra.mxu0 0
    %570 = vmatprep.subr.bf16.mxu0 0
    %571 = vmatpush1.bf16.msra.mxu0 0
    %572 = vmatprep.subr.bf16.mxu0 0
    %573 = vmatpush1.bf16.msra.mxu0 0
    %574 = vmatprep.mubr.bf16.mxu0 0
    %575 = vmatmul.mubr.bf16.gmra.mrb[0].mxu0 %v531
    %v576 = vpop.f32.mrb[0].mxu0
    %v577 = vadd.f32 0.0, %v576
    %v578 = vpop.f32.mrb[0].mxu0
    %v579 = vpop.f32.mrb[0].mxu0
    %v580 = vadd.f32 0.0, %v579
    %v581 = vpop.f32.mrb[0].mxu0
    %582 = vmatprep.mubr.bf16.mxu0 0
    %583 = vmatmul.mubr.bf16.gmra.mrb[0].mxu0 %v534
    %v584 = vpop.f32.mrb[0].mxu0
    %v585 = vadd.f32 0.0, %v584
    %v586 = vpop.f32.mrb[0].mxu0
    %v587 = vpop.f32.mrb[0].mxu0
    %v588 = vadd.f32 0.0, %v587
    %v589 = vpop.f32.mrb[0].mxu0
    %590 = vmatprep.mubr.bf16.mxu0 0
    %591 = vmatmul.mubr.bf16.gmra.mrb[0].mxu0 %v537
    %v592 = vpop.f32.mrb[0].mxu0
    %v593 = vadd.f32 0.0, %v592
    %v594 = vpop.f32.mrb[0].mxu0
    %v595 = vpop.f32.mrb[0].mxu0
    %v596 = vadd.f32 0.0, %v595
    %v597 = vpop.f32.mrb[0].mxu0
    %598 = vmatprep.mubr.bf16.mxu0 0
    %599 = vmatmul.mubr.bf16.gmra.mrb[0].mxu0 %v540
    %v600 = vpop.f32.mrb[0].mxu0
    %v601 = vadd.f32 0.0, %v600
    %v602 = vpop.f32.mrb[0].mxu0
    %v603 = vpop.f32.mrb[0].mxu0
    %v604 = vadd.f32 0.0, %v603
    %v605 = vpop.f32.mrb[0].mxu0
    %606 = vdwg.mxu0
    %v607 = vmax.f32 %v577, 0.0
    %v608 = vmax.f32 %v580, 0.0
    %v609 = vmax.f32 %v585, 0.0
    %v610 = vmax.f32 %v588, 0.0
    %v611 = vmax.f32 %v593, 0.0
    %v612 = vmax.f32 %v596, 0.0
    %v613 = vmax.f32 %v601, 0.0
    %v614 = vmax.f32 %v604, 0.0
    %v615 = vpack.c.bf16 %v608, %v607
    %v616 = vpack.c.bf16 %v610, %v609
    %v617 = vpack.c.bf16 %v612, %v611
    %v618 = vpack.c.bf16 %v614, %v613
    %v619 = vld [vmem:[%s4] sm:$0x1]
    %v621 = vsel %vm171, %v619, 0
    %v624 = vsel %vm171, %v615, 0
    %v627 = vsel %vm171, %v616, 0
    %v630 = vsel %vm171, %v617, 0
    %v633 = vsel %vm171, %v618, 0
    %635 = vmatprep.subr.bf16.mxu0 0
    %636 = vmatpush1.bf16.xpose.msra.mxu0 %v624
    %637 = vmatprep.subr.bf16.mxu0 0
    %638 = vmatpush1.bf16.xpose.msra.mxu0 %v627
    %639 = vmatprep.subr.bf16.mxu0 0
    %640 = vmatpush1.bf16.xpose.msra.mxu0 %v630
    %641 = vmatprep.subr.bf16.mxu0 0
    %642 = vmatpush1.bf16.xpose.msra.mxu0 %v633
    %643 = vmatprep.subr.bf16.mxu0 0
    %644 = vmatpush1.bf16.xpose.msra.mxu0 0
    %645 = vmatprep.subr.bf16.mxu0 0
    %646 = vmatpush1.bf16.xpose.msra.mxu0 0
    %647 = vmatprep.subr.bf16.mxu0 0
    %648 = vmatpush1.bf16.xpose.msra.mxu0 0
    %649 = vmatprep.subr.bf16.mxu0 0
    %650 = vmatpush1.bf16.xpose.msra.mxu0 0
    %651 = vmatprep.subr.bf16.mxu0 0
    %652 = vmatpush1.bf16.xpose.msra.mxu0 0
    %653 = vmatprep.subr.bf16.mxu0 0
    %654 = vmatpush1.bf16.xpose.msra.mxu0 0
    %655 = vmatprep.subr.bf16.mxu0 0
    %656 = vmatpush1.bf16.xpose.msra.mxu0 0
    %657 = vmatprep.subr.bf16.mxu0 0
    %658 = vmatpush1.bf16.xpose.msra.mxu0 0
    %659 = vmatprep.subr.bf16.mxu0 0
    %660 = vmatpush1.bf16.xpose.msra.mxu0 0
    %661 = vmatprep.subr.bf16.mxu0 0
    %662 = vmatpush1.bf16.xpose.msra.mxu0 0
    %663 = vmatprep.subr.bf16.mxu0 0
    %664 = vmatpush1.bf16.xpose.msra.mxu0 0
    %665 = vmatprep.subr.bf16.mxu0 0
    %666 = vmatpush1.bf16.xpose.msra.mxu0 0
    %667 = vmatprep.mubr.bf16.mxu0 0
    %668 = vmatmul.mubr.bf16.gmra.mrb[0].mxu0 %v621
    %v669 = vpop.f32.mrb[0].mxu0
    %v670 = vadd.f32 0.0, %v669
    %v671 = vpop.f32.mrb[0].mxu0
    %v672 = vpop.f32.mrb[0].mxu0
    %v673 = vpop.f32.mrb[0].mxu0
    %674 = vdwg.mxu0
    %v675 = vld [vmem:[%s2] sm:$0x1]
    %v676 = vlaneseq
    %v677 = vshrl.u32 %v676, 7
    %v678 = vlaneseq
    %v679 = vshrl.u32 %v678, 7
    %v680 = vsub.s32 0, %v679
    %v681 = vrot.slane %v675, %v680
    %vm682 = vcmp.eq.s32.totalorder %v677, %v681
    %v683 = vsel %vm682, 1, 0
    %v684 = vcvt.s32.f32 %v683
    %v685 = vlaneseq
    %v686 = vshrl.u32 %v685, 7
    %v687 = vsub.s32 0, %v686
    %v688 = vrot.slane %v670, %v687
    %v689 = vsel %vm682, %v688, -3e+38
    %vm690 = vcmask 517120
    %v691 = vsel %vm690, %v689, -inf
    %692 = vmax.xlane.f32.xlu0 %v691
    %v693 = vpop.xlane.xlu0 %692
    %v694 = vsub.f32 %v688, %v693
    %v695 = vsel %vm682, %v694, 0.0
    %v696 = vmul.f32 %v695, 1.442695
    %v697 = vpow.pop %v696
    %v698 = vmul.f32 %v684, %v697
    %v699 = vsel %vm690, %v698, 0.0
    %700 = vadd.xlane.f32.xlu0 %v699
    %v701 = vpop.xlane.xlu0 %700
    %v702 = vmax.f32 %v701, 1e-30
    %v703 = vrcp.pop %v702
    %v704 = vmul.f32 %v698, %v703
    %v706 = vsel %vm73, %v704, 0
    %708 = vmatprep.subr.mxu0 0.0
    %709 = vmatpush1.msra.mxu0 %v607
    %710 = vmatprep.subr.mxu0 0.0
    %711 = vmatpush1.msra.mxu0 %v608
    %712 = vmatprep.subr.mxu0 0.0
    %713 = vmatpush1.msra.mxu0 %v609
    %714 = vmatprep.subr.mxu0 0.0
    %715 = vmatpush1.msra.mxu0 %v610
    %716 = vmatprep.subr.mxu0 0.0
    %717 = vmatpush1.msra.mxu0 %v611
    %718 = vmatprep.subr.mxu0 0.0
    %719 = vmatpush1.msra.mxu0 %v612
    %720 = vmatprep.subr.mxu0 0.0
    %721 = vmatpush1.msra.mxu0 %v613
    %722 = vmatprep.subr.mxu0 0.0
    %723 = vmatpush1.msra.mxu0 %v614
    %724 = vmatprep.subr.mxu0 0.0
    %725 = vmatpush1.msra.mxu0 0.0
    %726 = vmatprep.subr.mxu0 0.0
    %727 = vmatpush1.msra.mxu0 0.0
    %728 = vmatprep.subr.mxu0 0.0
    %729 = vmatpush1.msra.mxu0 0.0
    %730 = vmatprep.subr.mxu0 0.0
    %731 = vmatpush1.msra.mxu0 0.0
    %732 = vmatprep.subr.mxu0 0.0
    %733 = vmatpush1.msra.mxu0 0.0
    %734 = vmatprep.subr.mxu0 0.0
    %735 = vmatpush1.msra.mxu0 0.0
    %736 = vmatprep.subr.mxu0 0.0
    %737 = vmatpush1.msra.mxu0 0.0
    %738 = vmatprep.subr.mxu0 0.0
    %739 = vmatpush1.msra.mxu0 0.0
    %740 = vmatprep.subr.mxu0 0.0
    %741 = vmatpush1.msra.mxu0 0.0
    %742 = vmatprep.subr.mxu0 0.0
    %743 = vmatpush1.msra.mxu0 0.0
    %744 = vmatprep.subr.mxu0 0.0
    %745 = vmatpush1.msra.mxu0 0.0
    %746 = vmatprep.subr.mxu0 0.0
    %747 = vmatpush1.msra.mxu0 0.0
    %748 = vmatprep.subr.mxu0 0.0
    %749 = vmatpush1.msra.mxu0 0.0
    %750 = vmatprep.subr.mxu0 0.0
    %751 = vmatpush1.msra.mxu0 0.0
    %752 = vmatprep.subr.mxu0 0.0
    %753 = vmatpush1.msra.mxu0 0.0
    %754 = vmatprep.subr.mxu0 0.0
    %755 = vmatpush1.msra.mxu0 0.0
    %756 = vmatprep.subr.mxu0 0.0
    %757 = vmatpush1.msra.mxu0 0.0
    %758 = vmatprep.subr.mxu0 0.0
    %759 = vmatpush1.msra.mxu0 0.0
    %760 = vmatprep.subr.mxu0 0.0
    %761 = vmatpush1.msra.mxu0 0.0
    %762 = vmatprep.subr.mxu0 0.0
    %763 = vmatpush1.msra.mxu0 0.0
    %764 = vmatprep.subr.mxu0 0.0
    %765 = vmatpush1.msra.mxu0 0.0
    %766 = vmatprep.subr.mxu0 0.0
    %767 = vmatpush1.msra.mxu0 0.0
    %768 = vmatprep.subr.mxu0 0.0
    %769 = vmatpush1.msra.mxu0 0.0
    %770 = vmatprep.subr.mxu0 0.0
    %771 = vmatpush1.msra.mxu0 0.0
    %772 = vmatprep.mubr.f32.mxu0 0.0
    %773 = vmatmul.mubr.f32.gmra.mrb[0].mxu0 %v706
    %v774 = vpop.f32.mrb[0].mxu0
    %v775 = vadd.f32 0.0, %v774
    %v776 = vpop.f32.mrb[0].mxu0
    %777 = vdwg.mxu0
    %v778 = vpack.c.bf16 %v775, %v775
    %s779 = scalar_lea.vmem %s3, 48
    %v780 = vld [vmem:[%s779] sm:$0xf]
    %v781 = vld [vmem:[%s779 + $0x4] sm:$0xf]
    %v782 = vld [vmem:[%s779 + $0x8] sm:$0xf]
    %v783 = vld [vmem:[%s779 + $0xc] sm:$0xf]
    %v784 = vld [vmem:[%s5] sm:$0x1]
    %v786 = vlaneseq
    %v787 = vshrl.u32 %v786, 7
    %v788 = vsub.s32 0, %v787
    %v789 = vrot.slane %v784, %v788
    %v795 = vunpack.c.l.b16 %v780
    %v796 = vunpack.c.l.b16 %v781
    %v797 = vunpack.c.l.b16 %v782
    %v798 = vunpack.c.l.b16 %v783
    %v799 = vpack.c.b16 %v796, %v795
    %v800 = vpack.c.b16 %v798, %v797
    %v804 = vsel %vm171, %v778, 0
    %806 = vmatprep.subr.bf16.mxu0 0
    %807 = vmatpush1.bf16.msra.mxu0 %v799
    %808 = vmatprep.subr.bf16.mxu0 0
    %809 = vmatpush1.bf16.msra.mxu0 %v800
    %810 = vmatprep.subr.bf16.mxu0 0
    %811 = vmatpush1.bf16.msra.mxu0 0
    %812 = vmatprep.subr.bf16.mxu0 0
    %813 = vmatpush1.bf16.msra.mxu0 0
    %814 = vmatprep.subr.bf16.mxu0 0
    %815 = vmatpush1.bf16.msra.mxu0 0
    %816 = vmatprep.subr.bf16.mxu0 0
    %817 = vmatpush1.bf16.msra.mxu0 0
    %818 = vmatprep.subr.bf16.mxu0 0
    %819 = vmatpush1.bf16.msra.mxu0 0
    %820 = vmatprep.subr.bf16.mxu0 0
    %821 = vmatpush1.bf16.msra.mxu0 0
    %822 = vmatprep.subr.bf16.mxu0 0
    %823 = vmatpush1.bf16.msra.mxu0 0
    %824 = vmatprep.subr.bf16.mxu0 0
    %825 = vmatpush1.bf16.msra.mxu0 0
    %826 = vmatprep.subr.bf16.mxu0 0
    %827 = vmatpush1.bf16.msra.mxu0 0
    %828 = vmatprep.subr.bf16.mxu0 0
    %829 = vmatpush1.bf16.msra.mxu0 0
    %830 = vmatprep.subr.bf16.mxu0 0
    %831 = vmatpush1.bf16.msra.mxu0 0
    %832 = vmatprep.subr.bf16.mxu0 0
    %833 = vmatpush1.bf16.msra.mxu0 0
    %834 = vmatprep.subr.bf16.mxu0 0
    %835 = vmatpush1.bf16.msra.mxu0 0
    %836 = vmatprep.subr.bf16.mxu0 0
    %837 = vmatpush1.bf16.msra.mxu0 0
    %838 = vmatprep.mubr.bf16.mxu0 0
    %839 = vmatmul.mubr.bf16.gmra.mrb[0].mxu0 %v804
    %v840 = vpop.f32.mrb[0].mxu0
    %v841 = vadd.f32 %v789, %v840
    %v842 = vpop.f32.mrb[0].mxu0
    %v843 = vpop.f32.mrb[0].mxu0
    %v844 = vpop.f32.mrb[0].mxu0
    %845 = vdwg.mxu0
    %vm846 = vcmask 254976
    %847 = vst.msk [vmem:[#allocation2] sm:$0x3] %vm846, %v841
    // Predicated region
    $region26: #{tpu_custom_call.1} parent=1 // pred_check
      _
    $region27: #{tpu_custom_call.1} parent=1 // pred_check_branch
      %849 = sbr.rel (0) target = $region29
    $region28: #{tpu_custom_call.1} parent=1 // pred_region
      %s851 = ssub.s32 32, 32
      %852 = vsyncadd [#allocation3], %s851
      %s854 = sshll.u32 [#allocation2], 4
      %s855 = int_to_ptr.vmem [resolvable:$true] %s854
      %857 = dma.vmem_to_hbm [thread:$0]  %s855, 32, %s6, [#allocation3]
    $region29: #{tpu_custom_call.1} parent=1 // pred_fallthru
      _
    // Predicated region
    $region30: #{tpu_custom_call.1} parent=1 // pred_check
      _
    $region31: #{tpu_custom_call.1} parent=1 // pred_check_branch
      %859 = sbr.rel (0) target = $region33
    $region32: #{tpu_custom_call.1} parent=1 // pred_region
      %860 = dma.done [#allocation3], 32
    $region33: #{tpu_custom_call.1} parent=1 // pred_fallthru
      _
    %861 = vsyncpa [#allocation3], 1

</llo_original>
